<compile_context>
chip_gen: v5e
topology: v5e:2x2
jax: 0.10.0
libtpu: 0.0.40
codegen_flags: <defaults>
</compile_context>

<pallas_src>
import jax
import jax.numpy as jnp
from jax.experimental import pallas as pl
from jax.experimental.pallas import tpu as pltpu

OBS_SPACE = 24
ACT_SPACE = 4
HIDDEN = 256
OUT_LANES = 128      # lane-dense padded output width (true output is column 0)
TB_MAX = 1024        # batch-tile rows; ~1.3 MiB double-buffered VMEM at most


def _round_up(x, m):
    return ((x + m - 1) // m) * m


def sac_critic_kernel(s_ref, a_ref, w1s_ref, w1a_ref, b1_ref,
                      w2_ref, b2_ref, w3_ref, b3_ref, q_ref):
    # Layer 1: split-weight matmul replaces the concat. bf16 inputs, f32 acc.
    h1 = (jnp.dot(s_ref[...], w1s_ref[...], preferred_element_type=jnp.float32)
          + jnp.dot(a_ref[...], w1a_ref[...], preferred_element_type=jnp.float32)
          + b1_ref[...])
    h1 = jnp.maximum(h1, 0.0)

    # Layer 2
    h2 = jnp.dot(h1.astype(jnp.bfloat16), w2_ref[...],
                 preferred_element_type=jnp.float32) + b2_ref[...]
    h2 = jnp.maximum(h2, 0.0)

    # Layer 3: lane-dense (TB, 128) output block; only column 0 is the real q.
    q = jnp.dot(h2.astype(jnp.bfloat16), w3_ref[...],
                preferred_element_type=jnp.float32) + b3_ref[...]
    q_ref[...] = q.astype(q_ref.dtype)


def sac_critic_forward(state, action, params):
    """state: (B, OBS_SPACE), action: (B, ACT_SPACE) -> q: (B, 1) float32."""
    w1, b1, w2, b2, w3, b3 = params
    B = state.shape[0]

    # ---- parameter prep (cheap; weights ~0.15 MB in bf16) -------------------
    w1s = w1[:OBS_SPACE, :].astype(jnp.bfloat16)          # (24, 256)
    w1a = w1[OBS_SPACE:, :].astype(jnp.bfloat16)          # (4, 256)
    w2b = w2.astype(jnp.bfloat16)                         # (256, 256)
    w3p = jnp.zeros((HIDDEN, OUT_LANES), jnp.float32).at[:, :1].set(w3)
    w3p = w3p.astype(jnp.bfloat16)                        # (256, 128) lane-dense
    b3p = jnp.zeros((1, OUT_LANES), jnp.float32).at[:, :1].set(b3)
    b1f = b1.astype(jnp.float32)
    b2f = b2.astype(jnp.float32)

    # ---- batch tiling --------------------------------------------------------
    tb = min(TB_MAX, _round_up(B, 8))
    b_pad = _round_up(B, tb)
    nb = b_pad // tb
    if b_pad != B:
        pad = ((0, b_pad - B), (0, 0))
        state = jnp.pad(state, pad)
        action = jnp.pad(action, pad)
    s_bf16 = state.astype(jnp.bfloat16)
    a_bf16 = action.astype(jnp.bfloat16)

    const2d = lambda i: (0, 0)   # weights stay resident across the batch grid
    tile = lambda i: (i, 0)      # batch-tiled inputs/outputs

    flops = 2 * b_pad * (OBS_SPACE * HIDDEN + ACT_SPACE * HIDDEN
                         + HIDDEN * HIDDEN + HIDDEN * OUT_LANES)
    weight_bytes = 2 * (OBS_SPACE * HIDDEN + ACT_SPACE * HIDDEN
                        + HIDDEN * HIDDEN + HIDDEN * OUT_LANES) \
        + 4 * (2 * HIDDEN + OUT_LANES)
    io_bytes = 2 * b_pad * (OBS_SPACE + ACT_SPACE) + 4 * b_pad * OUT_LANES

    q_pad = pl.pallas_call(
        sac_critic_kernel,
        out_shape=jax.ShapeDtypeStruct((b_pad, OUT_LANES), jnp.float32),
        grid=(nb,),
        in_specs=[
            pl.BlockSpec((tb, OBS_SPACE), tile),
            pl.BlockSpec((tb, ACT_SPACE), tile),
            pl.BlockSpec((OBS_SPACE, HIDDEN), const2d),
            pl.BlockSpec((ACT_SPACE, HIDDEN), const2d),
            pl.BlockSpec((1, HIDDEN), const2d),
            pl.BlockSpec((HIDDEN, HIDDEN), const2d),
            pl.BlockSpec((1, HIDDEN), const2d),
            pl.BlockSpec((HIDDEN, OUT_LANES), const2d),
            pl.BlockSpec((1, OUT_LANES), const2d),
        ],
        out_specs=pl.BlockSpec((tb, OUT_LANES), tile),
        compiler_params=pltpu.CompilerParams(
            dimension_semantics=("parallel",)),
        cost_estimate=pl.CostEstimate(
            flops=flops, transcendentals=0,
            bytes_accessed=weight_bytes + io_bytes),
    )(s_bf16, a_bf16, w1s, w1a, b1f, w2b, b2f, w3p, b3p)

    return q_pad[:B, :1]
    # TODO(synk): a real SAC setup has twin critics (Q1, Q2); fusing both into this
    # one pallas_call (shared input tiles, two lane-dense output columns) halves
    # launch/DMA cost, but the reference module defines a single critic.


def init_params(key):
    """Deterministic init mimicking PyTorch nn.Linear (uniform +/- 1/sqrt(fan_in)).

    Weights stored as (in_features, out_features) = transpose of torch Linear.weight.
    """
    d_in = OBS_SPACE + ACT_SPACE
    ks = jax.random.split(key, 6)

    def linear(kw, kb, fan_in, fan_out):
        bound = 1.0 / jnp.sqrt(fan_in)
        w = jax.random.uniform(kw, (fan_in, fan_out), jnp.float32, -bound, bound)
        b = jax.random.uniform(kb, (1, fan_out), jnp.float32, -bound, bound)
        return w, b

    w1, b1 = linear(ks[0], ks[1], d_in, HIDDEN)
    w2, b2 = linear(ks[2], ks[3], HIDDEN, HIDDEN)
    w3, b3 = linear(ks[4], ks[5], HIDDEN, 1)
    return (w1, b1, w2, b2, w3, b3)


if __name__ == "__main__":
    key = jax.random.PRNGKey(0)
    k_p, k_s, k_a = jax.random.split(key, 3)

    B = 8
    params = init_params(k_p)
    state = jax.random.normal(k_s, (B, OBS_SPACE), jnp.float32)
    action = jax.random.normal(k_a, (B, ACT_SPACE), jnp.float32)

    q = sac_critic_forward(state, action, params)
    q = jax.block_until_ready(q)

    # Reference in plain f32 JAX (same math as the PyTorch module).
    x = jnp.concatenate([state, action], axis=1)
    w1, b1, w2, b2, w3, b3 = params
    h1 = jnp.maximum(x @ w1 + b1, 0.0)
    h2 = jnp.maximum(h1 @ w2 + b2, 0.0)
    q_ref = h2 @ w3 + b3

    assert q.shape == (B, 1)
    # bf16 matmul inputs with f32 accumulation -> small numeric deltas vs f32 ref.
    assert jnp.allclose(q, q_ref, atol=3e-2, rtol=3e-2), (
        float(jnp.max(jnp.abs(q - q_ref))))

    print("KERNEL_OK")
</pallas_src>

<mosaic_0001>
module attributes {stable_mosaic.version = 11 : i64} {
  func.func @sac_critic_kernel(%arg0: i32, %arg1: memref<8x24xbf16, #tpu.memory_space<vmem>>, %arg2: memref<8x4xbf16, #tpu.memory_space<vmem>>, %arg3: memref<24x256xbf16, #tpu.memory_space<vmem>>, %arg4: memref<4x256xbf16, #tpu.memory_space<vmem>>, %arg5: memref<1x256xf32, #tpu.memory_space<vmem>>, %arg6: memref<256x256xbf16, #tpu.memory_space<vmem>>, %arg7: memref<1x256xf32, #tpu.memory_space<vmem>>, %arg8: memref<256x128xbf16, #tpu.memory_space<vmem>>, %arg9: memref<1x128xf32, #tpu.memory_space<vmem>>, %arg10: memref<8x128xf32, #tpu.memory_space<vmem>>) attributes {dimension_semantics = [#tpu.dimension_semantics<parallel>], iteration_bounds = array<i64: 1>, scalar_prefetch = 0 : i64, scratch_operands = 0 : i64, tpu.core_type = #tpu.core_type<tc>, window_params = [{transform_indices = @transform_0, window_bounds = array<i64: 8, 24>}, {transform_indices = @transform_1, window_bounds = array<i64: 8, 4>}, {pipeline_mode = #tpu.pipeline_mode<synchronous>, transform_indices = @transform_2, window_bounds = array<i64: 24, 256>}, {pipeline_mode = #tpu.pipeline_mode<synchronous>, transform_indices = @transform_3, window_bounds = array<i64: 4, 256>}, {pipeline_mode = #tpu.pipeline_mode<synchronous>, transform_indices = @transform_4, window_bounds = array<i64: 1, 256>}, {pipeline_mode = #tpu.pipeline_mode<synchronous>, transform_indices = @transform_5, window_bounds = array<i64: 256, 256>}, {pipeline_mode = #tpu.pipeline_mode<synchronous>, transform_indices = @transform_6, window_bounds = array<i64: 1, 256>}, {pipeline_mode = #tpu.pipeline_mode<synchronous>, transform_indices = @transform_7, window_bounds = array<i64: 256, 128>}, {pipeline_mode = #tpu.pipeline_mode<synchronous>, transform_indices = @transform_8, window_bounds = array<i64: 1, 128>}, {transform_indices = @transform_9, window_bounds = array<i64: 8, 128>}]} {
    %c0 = arith.constant 0 : index
    %c0_0 = arith.constant 0 : index
    %0 = vector.load %arg1[%c0, %c0_0] : memref<8x24xbf16, #tpu.memory_space<vmem>>, vector<8x24xbf16>
    %c0_1 = arith.constant 0 : index
    %c0_2 = arith.constant 0 : index
    %1 = vector.load %arg3[%c0_1, %c0_2] : memref<24x256xbf16, #tpu.memory_space<vmem>>, vector<24x256xbf16>
    %cst = arith.constant dense<0.000000e+00> : vector<8x256xf32>
    %2 = tpu.matmul %0, %1, %cst {dimension_numbers = #tpu.dot_dimension_numbers<[1], [0], [0], [1], [0, 0, 1, 1], [], []>} : vector<8x24xbf16>, vector<24x256xbf16>, vector<8x256xf32> -> vector<8x256xf32>
    %c0_3 = arith.constant 0 : index
    %c0_4 = arith.constant 0 : index
    %3 = vector.load %arg2[%c0_3, %c0_4] : memref<8x4xbf16, #tpu.memory_space<vmem>>, vector<8x4xbf16>
    %c0_5 = arith.constant 0 : index
    %c0_6 = arith.constant 0 : index
    %4 = vector.load %arg4[%c0_5, %c0_6] : memref<4x256xbf16, #tpu.memory_space<vmem>>, vector<4x256xbf16>
    %cst_7 = arith.constant dense<0.000000e+00> : vector<8x256xf32>
    %5 = tpu.matmul %3, %4, %cst_7 {dimension_numbers = #tpu.dot_dimension_numbers<[1], [0], [0], [1], [0, 0, 1, 1], [], []>} : vector<8x4xbf16>, vector<4x256xbf16>, vector<8x256xf32> -> vector<8x256xf32>
    %6 = arith.addf %2, %5 : vector<8x256xf32>
    %c0_8 = arith.constant 0 : index
    %c0_9 = arith.constant 0 : index
    %7 = vector.load %arg5[%c0_8, %c0_9] : memref<1x256xf32, #tpu.memory_space<vmem>>, vector<1x256xf32>
    %8 = vector.broadcast %7 : vector<1x256xf32> to vector<8x256xf32>
    %9 = arith.addf %6, %8 : vector<8x256xf32>
    %cst_10 = arith.constant 0.000000e+00 : f32
    %10 = vector.broadcast %cst_10 : f32 to vector<8x256xf32>
    %11 = arith.maximumf %9, %10 : vector<8x256xf32>
    %12 = arith.truncf %11 : vector<8x256xf32> to vector<8x256xbf16>
    %c0_11 = arith.constant 0 : index
    %c0_12 = arith.constant 0 : index
    %13 = vector.load %arg6[%c0_11, %c0_12] : memref<256x256xbf16, #tpu.memory_space<vmem>>, vector<256x256xbf16>
    %cst_13 = arith.constant dense<0.000000e+00> : vector<8x256xf32>
    %14 = tpu.matmul %12, %13, %cst_13 {dimension_numbers = #tpu.dot_dimension_numbers<[1], [0], [0], [1], [0, 0, 1, 1], [], []>} : vector<8x256xbf16>, vector<256x256xbf16>, vector<8x256xf32> -> vector<8x256xf32>
    %c0_14 = arith.constant 0 : index
    %c0_15 = arith.constant 0 : index
    %15 = vector.load %arg7[%c0_14, %c0_15] : memref<1x256xf32, #tpu.memory_space<vmem>>, vector<1x256xf32>
    %16 = vector.broadcast %15 : vector<1x256xf32> to vector<8x256xf32>
    %17 = arith.addf %14, %16 : vector<8x256xf32>
    %cst_16 = arith.constant 0.000000e+00 : f32
    %18 = vector.broadcast %cst_16 : f32 to vector<8x256xf32>
    %19 = arith.maximumf %17, %18 : vector<8x256xf32>
    %20 = arith.truncf %19 : vector<8x256xf32> to vector<8x256xbf16>
    %c0_17 = arith.constant 0 : index
    %c0_18 = arith.constant 0 : index
    %21 = vector.load %arg8[%c0_17, %c0_18] : memref<256x128xbf16, #tpu.memory_space<vmem>>, vector<256x128xbf16>
    %cst_19 = arith.constant dense<0.000000e+00> : vector<8x128xf32>
    %22 = tpu.matmul %20, %21, %cst_19 {dimension_numbers = #tpu.dot_dimension_numbers<[1], [0], [0], [1], [0, 0, 1, 1], [], []>} : vector<8x256xbf16>, vector<256x128xbf16>, vector<8x128xf32> -> vector<8x128xf32>
    %c0_20 = arith.constant 0 : index
    %c0_21 = arith.constant 0 : index
    %23 = vector.load %arg9[%c0_20, %c0_21] : memref<1x128xf32, #tpu.memory_space<vmem>>, vector<1x128xf32>
    %24 = vector.broadcast %23 : vector<1x128xf32> to vector<8x128xf32>
    %25 = arith.addf %22, %24 : vector<8x128xf32>
    %c0_22 = arith.constant 0 : index
    %c0_23 = arith.constant 0 : index
    %26 = vector.load %arg10[%c0_22, %c0_23] : memref<8x128xf32, #tpu.memory_space<vmem>>, vector<8x128xf32>
    tpu.vector_store %arg10[%c0_22, %c0_23], %25 {strides = array<i32>} : memref<8x128xf32, #tpu.memory_space<vmem>>, vector<8x128xf32>,
    return
  }
  func.func @transform_0(%arg0: i32) -> (i32, i32) {
    %c0_i32 = arith.constant 0 : i32
    %c0_i32_0 = arith.constant 0 : i32
    return %arg0, %c0_i32 : i32, i32
  }
  func.func @transform_1(%arg0: i32) -> (i32, i32) {
    %c0_i32 = arith.constant 0 : i32
    %c0_i32_0 = arith.constant 0 : i32
    return %arg0, %c0_i32 : i32, i32
  }
  func.func @transform_2(%arg0: i32) -> (i32, i32) {
    %c0_i32 = arith.constant 0 : i32
    %c0_i32_0 = arith.constant 0 : i32
    %c0_i32_1 = arith.constant 0 : i32
    return %c0_i32, %c0_i32_0 : i32, i32
  }
  func.func @transform_3(%arg0: i32) -> (i32, i32) {
    %c0_i32 = arith.constant 0 : i32
    %c0_i32_0 = arith.constant 0 : i32
    %c0_i32_1 = arith.constant 0 : i32
    return %c0_i32, %c0_i32_0 : i32, i32
  }
  func.func @transform_4(%arg0: i32) -> (i32, i32) {
    %c0_i32 = arith.constant 0 : i32
    %c0_i32_0 = arith.constant 0 : i32
    %c0_i32_1 = arith.constant 0 : i32
    return %c0_i32, %c0_i32_0 : i32, i32
  }
  func.func @transform_5(%arg0: i32) -> (i32, i32) {
    %c0_i32 = arith.constant 0 : i32
    %c0_i32_0 = arith.constant 0 : i32
    %c0_i32_1 = arith.constant 0 : i32
    return %c0_i32, %c0_i32_0 : i32, i32
  }
  func.func @transform_6(%arg0: i32) -> (i32, i32) {
    %c0_i32 = arith.constant 0 : i32
    %c0_i32_0 = arith.constant 0 : i32
    %c0_i32_1 = arith.constant 0 : i32
    return %c0_i32, %c0_i32_0 : i32, i32
  }
  func.func @transform_7(%arg0: i32) -> (i32, i32) {
    %c0_i32 = arith.constant 0 : i32
    %c0_i32_0 = arith.constant 0 : i32
    %c0_i32_1 = arith.constant 0 : i32
    return %c0_i32, %c0_i32_0 : i32, i32
  }
  func.func @transform_8(%arg0: i32) -> (i32, i32) {
    %c0_i32 = arith.constant 0 : i32
    %c0_i32_0 = arith.constant 0 : i32
    %c0_i32_1 = arith.constant 0 : i32
    return %c0_i32, %c0_i32_0 : i32, i32
  }
  func.func @transform_9(%arg0: i32) -> (i32, i32) {
    %c0_i32 = arith.constant 0 : i32
    %c0_i32_0 = arith.constant 0 : i32
    return %arg0, %c0_i32 : i32, i32
  }
}

</mosaic_0001>

<llo_original>
// kernel: tpu_custom_call.1
$region0: #{tpu_custom_call.1}
  #allocation0 [shape = 'u32[]', space=smem, size = 0x4, offset = 0x4, fixed_abs, tag = 'smem constant byte address 0x4 - core index']
  #allocation1 [shape = 'u32[72,128]{1,0:T(1,128)}', space=vmem, size = 0x9000, scoped, tag = 'internal scratch']
  %s0 = inlined_call_operand.vmem [shape: bf16[8,24], index: 0, kind: input, shape index: {}]
  %s1 = inlined_call_operand.vmem [shape: bf16[8,4], index: 1, kind: input, shape index: {}]
  %s2 = inlined_call_operand.hbm [shape: bf16[24,256], index: 2, kind: input, shape index: {}]
  %s3 = inlined_call_operand.vmem [shape: bf16[4,256], index: 3, kind: input, shape index: {}]
  %s4 = inlined_call_operand.hbm [shape: f32[1,256], index: 4, kind: input, shape index: {}]
  %s5 = inlined_call_operand.hbm [shape: bf16[256,256], index: 5, kind: input, shape index: {}]
  %s6 = inlined_call_operand.vmem [shape: f32[1,256], index: 6, kind: input, shape index: {}]
  %s7 = inlined_call_operand.hbm [shape: bf16[256,128], index: 7, kind: input, shape index: {}]
  %s8 = inlined_call_operand.vmem [shape: f32[1,128], index: 8, kind: input, shape index: {}]
  %s9 = inlined_call_operand.hbm [shape: f32[8,128], index: 9, kind: output, shape index: {}]
  %s10 = sld [smem:[#allocation0]]
  $region62: #{tpu_custom_call.1} parent=0
    _
  %s12 = ssub.s32 1, %s10
  %s13 = scalar_select 0, %s12, %s10
  $region1: #{tpu_custom_call.1} parent=0
    #allocation2 [shape = 'u8[12288]{0}', space=vmem, size = 0x3000, scoped, tag = 'input window, operand 2, single buffered']
    #allocation3 [shape = 's32[1]{0}', space=sflag, size = 0x4, scoped, tag = 'scoped memory for tpu_custom_call.1']
    #allocation4 [shape = 's32[1]{0}', space=sflag, size = 0x4, scoped, tag = 'scoped memory for tpu_custom_call.1']
    #allocation5 [shape = 'u8[1024]{0}', space=vmem, size = 0x400, scoped, tag = 'input window, operand 4, single buffered']
    #allocation6 [shape = 's32[1]{0}', space=sflag, size = 0x4, scoped, tag = 'scoped memory for tpu_custom_call.1']
    #allocation7 [shape = 'u8[131072]{0}', space=vmem, size = 0x20000, scoped, tag = 'input window, operand 5, single buffered']
    #allocation8 [shape = 'u8[65536]{0}', space=vmem, size = 0x10000, scoped, tag = 'input window, operand 7, single buffered']
    #allocation9 [shape = 's32[1]{0}', space=sflag, size = 0x4, scoped, tag = 'scoped memory for tpu_custom_call.1']
    #allocation10 [shape = 'u8[4096]{0}', space=vmem, size = 0x1000, scoped, tag = 'output window, operand 0, single buffered']
    %14 = vsyncpa [#allocation3], 0
    %15 = vsyncpa [#allocation6], 0
    %16 = vsyncpa [#allocation9], 0
    %17 = vsyncpa [#allocation4], 0
    // Predicated region
    $region2: #{tpu_custom_call.1} parent=1 // pred_check
      _
    $region3: #{tpu_custom_call.1} parent=1 // pred_check_branch
      %19 = sbr.rel (0) target = $region5
    $region4: #{tpu_custom_call.1} parent=1 // pred_region
      _
    $region5: #{tpu_custom_call.1} parent=1 // pred_fallthru
      _
    // Predicated region
    $region6: #{tpu_custom_call.1} parent=1 // pred_check
      _
    $region7: #{tpu_custom_call.1} parent=1 // pred_check_branch
      %21 = sbr.rel (0) target = $region9
    $region8: #{tpu_custom_call.1} parent=1 // pred_region
      _
    $region9: #{tpu_custom_call.1} parent=1 // pred_fallthru
      _
    // Predicated region
    $region10: #{tpu_custom_call.1} parent=1 // pred_check
      _
    $region11: #{tpu_custom_call.1} parent=1 // pred_check_branch
      %23 = sbr.rel (0) target = $region13
    $region12: #{tpu_custom_call.1} parent=1 // pred_region
      %25 = vsyncadd [#allocation3], 0
      %s26 = sshll.u32 %s2, 4
      %s27 = int_to_ptr.hbm [resolvable:$true] %s26
      %s28 = sshll.u32 [#allocation2], 4
      %s29 = int_to_ptr.vmem [resolvable:$true] %s28
      %34 = dma.hbm_to_vmem [thread:$0]  %s27, 384, %s29, [#allocation3], 128, 128, 8
    $region13: #{tpu_custom_call.1} parent=1 // pred_fallthru
      _
    // Predicated region
    $region14: #{tpu_custom_call.1} parent=1 // pred_check
      _
    $region15: #{tpu_custom_call.1} parent=1 // pred_check_branch
      %36 = sbr.rel (0) target = $region17
    $region16: #{tpu_custom_call.1} parent=1 // pred_region
      _
    $region17: #{tpu_custom_call.1} parent=1 // pred_fallthru
      _
    // Predicated region
    $region18: #{tpu_custom_call.1} parent=1 // pred_check
      _
    $region19: #{tpu_custom_call.1} parent=1 // pred_check_branch
      %38 = sbr.rel (0) target = $region21
    $region20: #{tpu_custom_call.1} parent=1 // pred_region
      %40 = vsyncadd [#allocation6], 0
      %s42 = sshll.u32 %s4, 4
      %s43 = int_to_ptr.hbm [resolvable:$true] %s42
      %s44 = sshll.u32 [#allocation5], 4
      %s45 = int_to_ptr.vmem [resolvable:$true] %s44
      %47 = dma.hbm_to_vmem [thread:$0]  %s43, 32, %s45, [#allocation6]
    $region21: #{tpu_custom_call.1} parent=1 // pred_fallthru
      _
    // Predicated region
    $region22: #{tpu_custom_call.1} parent=1 // pred_check
      _
    $region23: #{tpu_custom_call.1} parent=1 // pred_check_branch
      %49 = sbr.rel (0) target = $region25
    $region24: #{tpu_custom_call.1} parent=1 // pred_region
      %51 = vsyncadd [#allocation6], 0
      %s52 = sshll.u32 %s5, 4
      %s53 = int_to_ptr.hbm [resolvable:$true] %s52
      %s54 = sshll.u32 [#allocation7], 4
      %s55 = int_to_ptr.vmem [resolvable:$true] %s54
      %60 = dma.hbm_to_vmem [thread:$0]  %s53, 4096, %s55, [#allocation6], 128, 128, 8
    $region25: #{tpu_custom_call.1} parent=1 // pred_fallthru
      _
    // Predicated region
    $region26: #{tpu_custom_call.1} parent=1 // pred_check
      _
    $region27: #{tpu_custom_call.1} parent=1 // pred_check_branch
      %62 = sbr.rel (0) target = $region29
    $region28: #{tpu_custom_call.1} parent=1 // pred_region
      _
    $region29: #{tpu_custom_call.1} parent=1 // pred_fallthru
      _
    // Predicated region
    $region30: #{tpu_custom_call.1} parent=1 // pred_check
      _
    $region31: #{tpu_custom_call.1} parent=1 // pred_check_branch
      %64 = sbr.rel (0) target = $region33
    $region32: #{tpu_custom_call.1} parent=1 // pred_region
      %66 = vsyncadd [#allocation9], 0
      %s67 = sshll.u32 %s7, 4
      %s68 = int_to_ptr.hbm [resolvable:$true] %s67
      %s69 = sshll.u32 [#allocation8], 4
      %s70 = int_to_ptr.vmem [resolvable:$true] %s69
      %75 = dma.hbm_to_vmem [thread:$0]  %s68, 2048, %s70, [#allocation9], 64, 64, 4
    $region33: #{tpu_custom_call.1} parent=1 // pred_fallthru
      _
    // Predicated region
    $region34: #{tpu_custom_call.1} parent=1 // pred_check
      _
    $region35: #{tpu_custom_call.1} parent=1 // pred_check_branch
      %77 = sbr.rel (0) target = $region37
    $region36: #{tpu_custom_call.1} parent=1 // pred_region
      _
    $region37: #{tpu_custom_call.1} parent=1 // pred_fallthru
      _
    // Predicated region
    $region38: #{tpu_custom_call.1} parent=1 // pred_check
      _
    $region39: #{tpu_custom_call.1} parent=1 // pred_check_branch
      %79 = sbr.rel (0) target = $region41
    $region40: #{tpu_custom_call.1} parent=1 // pred_region
      %81 = dma.done [#allocation3], 384
    $region41: #{tpu_custom_call.1} parent=1 // pred_fallthru
      _
    // Predicated region
    $region42: #{tpu_custom_call.1} parent=1 // pred_check
      _
    $region43: #{tpu_custom_call.1} parent=1 // pred_check_branch
      %83 = sbr.rel (0) target = $region45
    $region44: #{tpu_custom_call.1} parent=1 // pred_region
      %85 = dma.done [#allocation6], 32
    $region45: #{tpu_custom_call.1} parent=1 // pred_fallthru
      _
    // Predicated region
    $region46: #{tpu_custom_call.1} parent=1 // pred_check
      _
    $region47: #{tpu_custom_call.1} parent=1 // pred_check_branch
      %87 = sbr.rel (0) target = $region49
    $region48: #{tpu_custom_call.1} parent=1 // pred_region
      %89 = dma.done [#allocation6], 4096
    $region49: #{tpu_custom_call.1} parent=1 // pred_fallthru
      _
    // Predicated region
    $region50: #{tpu_custom_call.1} parent=1 // pred_check
      _
    $region51: #{tpu_custom_call.1} parent=1 // pred_check_branch
      %91 = sbr.rel (0) target = $region53
    $region52: #{tpu_custom_call.1} parent=1 // pred_region
      %93 = dma.done [#allocation9], 2048
    $region53: #{tpu_custom_call.1} parent=1 // pred_fallthru
      _
    %v95 = vld [vmem:[%s0] sm:$0xf]
    %v96 = vld [vmem:[#allocation2] sm:$0xff]
    %v97 = vld [vmem:[#allocation2 + $0x8] sm:$0xff]
    %v98 = vld [vmem:[#allocation2 + $0x10] sm:$0xff]
    %v99 = vld [vmem:[%s1] sm:$0xf]
    %v100 = vld [vmem:[%s3] sm:$0xf]
    %102 = vst [vmem:[#allocation1] ss:$4 sm:$0xff] %v100
    %v103 = vld.sshfl [vmem:[#allocation1] sm:$0xff pattern:$0x73625140]
    %v104 = vld.sshfl [vmem:[#allocation1 + $0x8] sm:$0xff pattern:$0x73625140]
    %vm105 = vcmask 31744
    %v107 = vsel %vm105, %v99, 0
    %vm109 = vcmask 1041408
    %v110 = vsel %vm109, %v103, 0
    %v112 = vsel %vm109, %v104, 0
    %114 = vmatpush.bf16.msra.mxu0 0
    %115 = vmatpush.bf16.msra.mxu0 0
    %116 = vmatpush.bf16.msra.mxu0 0
    %117 = vmatpush.bf16.msra.mxu0 0
    %118 = vmatpush.bf16.msra.mxu0 0
    %119 = vmatpush.bf16.msra.mxu0 0
    %120 = vmatpush.bf16.msra.mxu0 0
    %121 = vmatpush.bf16.msra.mxu0 %v110
    %122 = vmatmul.bf16.gmra.mxu0 %v107
    %v123 = vpop.f32.mrf.mxu0
    %v124 = vadd.f32 0.0, %v123
    %v125 = vpop.f32.mrf.mxu0
    %126 = vdwg.mxu0
    %127 = vmatpush.bf16.msra.mxu0 0
    %128 = vmatpush.bf16.msra.mxu0 0
    %129 = vmatpush.bf16.msra.mxu0 0
    %130 = vmatpush.bf16.msra.mxu0 0
    %131 = vmatpush.bf16.msra.mxu0 0
    %132 = vmatpush.bf16.msra.mxu0 0
    %133 = vmatpush.bf16.msra.mxu0 0
    %134 = vmatpush.bf16.msra.mxu0 %v112
    %135 = vmatmul.bf16.gmra.mxu0 %v107
    %v136 = vpop.f32.mrf.mxu0
    %v137 = vadd.f32 0.0, %v136
    %v138 = vpop.f32.mrf.mxu0
    %139 = vdwg.mxu0
    %v143 = vunpack.c.l.b16 %v96
    %v144 = vunpack.c.h.b16 %v96
    %v145 = vunpack.c.l.b16 %v97
    %v146 = vunpack.c.h.b16 %v97
    %v147 = vunpack.c.l.b16 %v98
    %v148 = vunpack.c.h.b16 %v98
    %v149 = vpack.c.b16 %v145, %v143
    %v150 = vpack.c.b16 %v146, %v144
    %v151 = vpack.c.b16 %v147, %v147
    %v152 = vpack.c.b16 %v148, %v148
    %vm155 = vcmask 195584
    %v157 = vsel %vm155, %v95, 0
    %vm159 = vcmask 1043456
    %v161 = vsel %vm159, %v151, 0
    %v164 = vsel %vm159, %v152, 0
    %166 = vmatpush.bf16.msra.mxu0 0
    %167 = vmatpush.bf16.msra.mxu0 0
    %168 = vmatpush.bf16.msra.mxu0 0
    %169 = vmatpush.bf16.msra.mxu0 0
    %170 = vmatpush.bf16.msra.mxu0 0
    %171 = vmatpush.bf16.msra.mxu0 0
    %172 = vmatpush.bf16.msra.mxu0 %v161
    %173 = vmatpush.bf16.msra.mxu0 %v149
    %174 = vmatmul.bf16.gmra.mxu0 %v157
    %v175 = vpop.f32.mrf.mxu0
    %v176 = vadd.f32 %v124, %v175
    %v177 = vpop.f32.mrf.mxu0
    %178 = vdwg.mxu0
    %179 = vmatpush.bf16.msra.mxu0 0
    %180 = vmatpush.bf16.msra.mxu0 0
    %181 = vmatpush.bf16.msra.mxu0 0
    %182 = vmatpush.bf16.msra.mxu0 0
    %183 = vmatpush.bf16.msra.mxu0 0
    %184 = vmatpush.bf16.msra.mxu0 0
    %185 = vmatpush.bf16.msra.mxu0 %v164
    %186 = vmatpush.bf16.msra.mxu0 %v150
    %187 = vmatmul.bf16.gmra.mxu0 %v157
    %v188 = vpop.f32.mrf.mxu0
    %v189 = vadd.f32 %v137, %v188
    %v190 = vpop.f32.mrf.mxu0
    %191 = vdwg.mxu0
    %v192 = vld [vmem:[#allocation5] sm:$0x3]
    %v194 = vperm.slane %v192, 0
    %v195 = vperm.slane %v192, 1
    %v198 = vadd.f32 %v176, %v194
    %v199 = vadd.f32 %v189, %v195
    %v200 = vmax.f32 %v198, 0.0
    %v201 = vmax.f32 %v199, 0.0
    %v202 = vpack.c.bf16 %v200, %v200
    %v203 = vpack.c.bf16 %v201, %v201
    %v204 = vld [vmem:[#allocation7] sm:$0xff]
    %v205 = vld [vmem:[#allocation7 + $0x8] sm:$0xff]
    %v206 = vld [vmem:[#allocation7 + $0x10] sm:$0xff]
    %v207 = vld [vmem:[#allocation7 + $0x18] sm:$0xff]
    %v208 = vld [vmem:[#allocation7 + $0x20] sm:$0xff]
    %v209 = vld [vmem:[#allocation7 + $0x28] sm:$0xff]
    %v210 = vld [vmem:[#allocation7 + $0x30] sm:$0xff]
    %v211 = vld [vmem:[#allocation7 + $0x38] sm:$0xff]
    %v212 = vld [vmem:[#allocation7 + $0x40] sm:$0xff]
    %v213 = vld [vmem:[#allocation7 + $0x48] sm:$0xff]
    %v214 = vld [vmem:[#allocation7 + $0x50] sm:$0xff]
    %v215 = vld [vmem:[#allocation7 + $0x58] sm:$0xff]
    %v216 = vld [vmem:[#allocation7 + $0x60] sm:$0xff]
    %v217 = vld [vmem:[#allocation7 + $0x68] sm:$0xff]
    %v218 = vld [vmem:[#allocation7 + $0x70] sm:$0xff]
    %v219 = vld [vmem:[#allocation7 + $0x78] sm:$0xff]
    %v220 = vld [vmem:[#allocation7 + $0x80] sm:$0xff]
    %v221 = vld [vmem:[#allocation7 + $0x88] sm:$0xff]
    %v222 = vld [vmem:[#allocation7 + $0x90] sm:$0xff]
    %v223 = vld [vmem:[#allocation7 + $0x98] sm:$0xff]
    %v224 = vld [vmem:[#allocation7 + $0xa0] sm:$0xff]
    %v225 = vld [vmem:[#allocation7 + $0xa8] sm:$0xff]
    %v226 = vld [vmem:[#allocation7 + $0xb0] sm:$0xff]
    %v227 = vld [vmem:[#allocation7 + $0xb8] sm:$0xff]
    %v228 = vld [vmem:[#allocation7 + $0xc0] sm:$0xff]
    %v229 = vld [vmem:[#allocation7 + $0xc8] sm:$0xff]
    %v230 = vld [vmem:[#allocation7 + $0xd0] sm:$0xff]
    %v231 = vld [vmem:[#allocation7 + $0xd8] sm:$0xff]
    %v232 = vld [vmem:[#allocation7 + $0xe0] sm:$0xff]
    %v233 = vld [vmem:[#allocation7 + $0xe8] sm:$0xff]
    %v234 = vld [vmem:[#allocation7 + $0xf0] sm:$0xff]
    %v235 = vld [vmem:[#allocation7 + $0xf8] sm:$0xff]
    %v236 = vld [vmem:[%s6] sm:$0x3]
    %v238 = vperm.slane %v236, 0
    %v239 = vperm.slane %v236, 1
    %v274 = vunpack.c.l.b16 %v204
    %v275 = vunpack.c.h.b16 %v204
    %v276 = vunpack.c.l.b16 %v205
    %v277 = vunpack.c.h.b16 %v205
    %v278 = vunpack.c.l.b16 %v206
    %v279 = vunpack.c.h.b16 %v206
    %v280 = vunpack.c.l.b16 %v207
    %v281 = vunpack.c.h.b16 %v207
    %v282 = vunpack.c.l.b16 %v208
    %v283 = vunpack.c.h.b16 %v208
    %v284 = vunpack.c.l.b16 %v209
    %v285 = vunpack.c.h.b16 %v209
    %v286 = vunpack.c.l.b16 %v210
    %v287 = vunpack.c.h.b16 %v210
    %v288 = vunpack.c.l.b16 %v211
    %v289 = vunpack.c.h.b16 %v211
    %v290 = vunpack.c.l.b16 %v212
    %v291 = vunpack.c.h.b16 %v212
    %v292 = vunpack.c.l.b16 %v213
    %v293 = vunpack.c.h.b16 %v213
    %v294 = vunpack.c.l.b16 %v214
    %v295 = vunpack.c.h.b16 %v214
    %v296 = vunpack.c.l.b16 %v215
    %v297 = vunpack.c.h.b16 %v215
    %v298 = vunpack.c.l.b16 %v216
    %v299 = vunpack.c.h.b16 %v216
    %v300 = vunpack.c.l.b16 %v217
    %v301 = vunpack.c.h.b16 %v217
    %v302 = vunpack.c.l.b16 %v218
    %v303 = vunpack.c.h.b16 %v218
    %v304 = vunpack.c.l.b16 %v219
    %v305 = vunpack.c.h.b16 %v219
    %v306 = vunpack.c.l.b16 %v220
    %v307 = vunpack.c.h.b16 %v220
    %v308 = vunpack.c.l.b16 %v221
    %v309 = vunpack.c.h.b16 %v221
    %v310 = vunpack.c.l.b16 %v222
    %v311 = vunpack.c.h.b16 %v222
    %v312 = vunpack.c.l.b16 %v223
    %v313 = vunpack.c.h.b16 %v223
    %v314 = vunpack.c.l.b16 %v224
    %v315 = vunpack.c.h.b16 %v224
    %v316 = vunpack.c.l.b16 %v225
    %v317 = vunpack.c.h.b16 %v225
    %v318 = vunpack.c.l.b16 %v226
    %v319 = vunpack.c.h.b16 %v226
    %v320 = vunpack.c.l.b16 %v227
    %v321 = vunpack.c.h.b16 %v227
    %v322 = vunpack.c.l.b16 %v228
    %v323 = vunpack.c.h.b16 %v228
    %v324 = vunpack.c.l.b16 %v229
    %v325 = vunpack.c.h.b16 %v229
    %v326 = vunpack.c.l.b16 %v230
    %v327 = vunpack.c.h.b16 %v230
    %v328 = vunpack.c.l.b16 %v231
    %v329 = vunpack.c.h.b16 %v231
    %v330 = vunpack.c.l.b16 %v232
    %v331 = vunpack.c.h.b16 %v232
    %v332 = vunpack.c.l.b16 %v233
    %v333 = vunpack.c.h.b16 %v233
    %v334 = vunpack.c.l.b16 %v234
    %v335 = vunpack.c.h.b16 %v234
    %v336 = vunpack.c.l.b16 %v235
    %v337 = vunpack.c.h.b16 %v235
    %v338 = vpack.c.b16 %v276, %v274
    %v339 = vpack.c.b16 %v277, %v275
    %v340 = vpack.c.b16 %v280, %v278
    %v341 = vpack.c.b16 %v281, %v279
    %v342 = vpack.c.b16 %v284, %v282
    %v343 = vpack.c.b16 %v285, %v283
    %v344 = vpack.c.b16 %v288, %v286
    %v345 = vpack.c.b16 %v289, %v287
    %v346 = vpack.c.b16 %v292, %v290
    %v347 = vpack.c.b16 %v293, %v291
    %v348 = vpack.c.b16 %v296, %v294
    %v349 = vpack.c.b16 %v297, %v295
    %v350 = vpack.c.b16 %v300, %v298
    %v351 = vpack.c.b16 %v301, %v299
    %v352 = vpack.c.b16 %v304, %v302
    %v353 = vpack.c.b16 %v305, %v303
    %v354 = vpack.c.b16 %v308, %v306
    %v355 = vpack.c.b16 %v309, %v307
    %v356 = vpack.c.b16 %v312, %v310
    %v357 = vpack.c.b16 %v313, %v311
    %v358 = vpack.c.b16 %v316, %v314
    %v359 = vpack.c.b16 %v317, %v315
    %v360 = vpack.c.b16 %v320, %v318
    %v361 = vpack.c.b16 %v321, %v319
    %v362 = vpack.c.b16 %v324, %v322
    %v363 = vpack.c.b16 %v325, %v323
    %v364 = vpack.c.b16 %v328, %v326
    %v365 = vpack.c.b16 %v329, %v327
    %v366 = vpack.c.b16 %v332, %v330
    %v367 = vpack.c.b16 %v333, %v331
    %v368 = vpack.c.b16 %v336, %v334
    %v369 = vpack.c.b16 %v337, %v335
    %402 = vmatpush.bf16.msra.mxu0 %v352
    %403 = vmatpush.bf16.msra.mxu0 %v350
    %404 = vmatpush.bf16.msra.mxu0 %v348
    %405 = vmatpush.bf16.msra.mxu0 %v346
    %406 = vmatpush.bf16.msra.mxu0 %v344
    %407 = vmatpush.bf16.msra.mxu0 %v342
    %408 = vmatpush.bf16.msra.mxu0 %v340
    %409 = vmatpush.bf16.msra.mxu0 %v338
    %410 = vmatmul.bf16.gmra.mxu0 %v202
    %v411 = vpop.f32.mrf.mxu0
    %v412 = vadd.f32 %v238, %v411
    %v413 = vpop.f32.mrf.mxu0
    %414 = vdwg.mxu0
    %415 = vmatpush.bf16.msra.mxu0 %v368
    %416 = vmatpush.bf16.msra.mxu0 %v366
    %417 = vmatpush.bf16.msra.mxu0 %v364
    %418 = vmatpush.bf16.msra.mxu0 %v362
    %419 = vmatpush.bf16.msra.mxu0 %v360
    %420 = vmatpush.bf16.msra.mxu0 %v358
    %421 = vmatpush.bf16.msra.mxu0 %v356
    %422 = vmatpush.bf16.msra.mxu0 %v354
    %423 = vmatmul.bf16.gmra.mxu0 %v203
    %v424 = vpop.f32.mrf.mxu0
    %v425 = vadd.f32 %v412, %v424
    %v426 = vpop.f32.mrf.mxu0
    %427 = vdwg.mxu0
    %428 = vmatpush.bf16.msra.mxu0 %v353
    %429 = vmatpush.bf16.msra.mxu0 %v351
    %430 = vmatpush.bf16.msra.mxu0 %v349
    %431 = vmatpush.bf16.msra.mxu0 %v347
    %432 = vmatpush.bf16.msra.mxu0 %v345
    %433 = vmatpush.bf16.msra.mxu0 %v343
    %434 = vmatpush.bf16.msra.mxu0 %v341
    %435 = vmatpush.bf16.msra.mxu0 %v339
    %436 = vmatmul.bf16.gmra.mxu0 %v202
    %v437 = vpop.f32.mrf.mxu0
    %v438 = vadd.f32 %v239, %v437
    %v439 = vpop.f32.mrf.mxu0
    %440 = vdwg.mxu0
    %441 = vmatpush.bf16.msra.mxu0 %v369
    %442 = vmatpush.bf16.msra.mxu0 %v367
    %443 = vmatpush.bf16.msra.mxu0 %v365
    %444 = vmatpush.bf16.msra.mxu0 %v363
    %445 = vmatpush.bf16.msra.mxu0 %v361
    %446 = vmatpush.bf16.msra.mxu0 %v359
    %447 = vmatpush.bf16.msra.mxu0 %v357
    %448 = vmatpush.bf16.msra.mxu0 %v355
    %449 = vmatmul.bf16.gmra.mxu0 %v203
    %v450 = vpop.f32.mrf.mxu0
    %v451 = vadd.f32 %v438, %v450
    %v452 = vpop.f32.mrf.mxu0
    %453 = vdwg.mxu0
    %v454 = vmax.f32 %v425, 0.0
    %v455 = vmax.f32 %v451, 0.0
    %v456 = vpack.c.bf16 %v454, %v454
    %v457 = vpack.c.bf16 %v455, %v455
    %v458 = vld [vmem:[#allocation8] sm:$0xf]
    %v459 = vld [vmem:[#allocation8 + $0x4] sm:$0xf]
    %v460 = vld [vmem:[#allocation8 + $0x8] sm:$0xf]
    %v461 = vld [vmem:[#allocation8 + $0xc] sm:$0xf]
    %v462 = vld [vmem:[#allocation8 + $0x10] sm:$0xf]
    %v463 = vld [vmem:[#allocation8 + $0x14] sm:$0xf]
    %v464 = vld [vmem:[#allocation8 + $0x18] sm:$0xf]
    %v465 = vld [vmem:[#allocation8 + $0x1c] sm:$0xf]
    %v466 = vld [vmem:[#allocation8 + $0x20] sm:$0xf]
    %v467 = vld [vmem:[#allocation8 + $0x24] sm:$0xf]
    %v468 = vld [vmem:[#allocation8 + $0x28] sm:$0xf]
    %v469 = vld [vmem:[#allocation8 + $0x2c] sm:$0xf]
    %v470 = vld [vmem:[#allocation8 + $0x30] sm:$0xf]
    %v471 = vld [vmem:[#allocation8 + $0x34] sm:$0xf]
    %v472 = vld [vmem:[#allocation8 + $0x38] sm:$0xf]
    %v473 = vld [vmem:[#allocation8 + $0x3c] sm:$0xf]
    %v474 = vld [vmem:[#allocation8 + $0x40] sm:$0xf]
    %v475 = vld [vmem:[#allocation8 + $0x44] sm:$0xf]
    %v476 = vld [vmem:[#allocation8 + $0x48] sm:$0xf]
    %v477 = vld [vmem:[#allocation8 + $0x4c] sm:$0xf]
    %v478 = vld [vmem:[#allocation8 + $0x50] sm:$0xf]
    %v479 = vld [vmem:[#allocation8 + $0x54] sm:$0xf]
    %v480 = vld [vmem:[#allocation8 + $0x58] sm:$0xf]
    %v481 = vld [vmem:[#allocation8 + $0x5c] sm:$0xf]
    %v482 = vld [vmem:[#allocation8 + $0x60] sm:$0xf]
    %v483 = vld [vmem:[#allocation8 + $0x64] sm:$0xf]
    %v484 = vld [vmem:[#allocation8 + $0x68] sm:$0xf]
    %v485 = vld [vmem:[#allocation8 + $0x6c] sm:$0xf]
    %v486 = vld [vmem:[#allocation8 + $0x70] sm:$0xf]
    %v487 = vld [vmem:[#allocation8 + $0x74] sm:$0xf]
    %v488 = vld [vmem:[#allocation8 + $0x78] sm:$0xf]
    %v489 = vld [vmem:[#allocation8 + $0x7c] sm:$0xf]
    %v490 = vld [vmem:[%s8] sm:$0x1]
    %v492 = vperm.slane %v490, 0
    %v526 = vunpack.c.l.b16 %v458
    %v527 = vunpack.c.l.b16 %v459
    %v528 = vunpack.c.l.b16 %v460
    %v529 = vunpack.c.l.b16 %v461
    %v530 = vunpack.c.l.b16 %v462
    %v531 = vunpack.c.l.b16 %v463
    %v532 = vunpack.c.l.b16 %v464
    %v533 = vunpack.c.l.b16 %v465
    %v534 = vunpack.c.l.b16 %v466
    %v535 = vunpack.c.l.b16 %v467
    %v536 = vunpack.c.l.b16 %v468
    %v537 = vunpack.c.l.b16 %v469
    %v538 = vunpack.c.l.b16 %v470
    %v539 = vunpack.c.l.b16 %v471
    %v540 = vunpack.c.l.b16 %v472
    %v541 = vunpack.c.l.b16 %v473
    %v542 = vunpack.c.l.b16 %v474
    %v543 = vunpack.c.l.b16 %v475
    %v544 = vunpack.c.l.b16 %v476
    %v545 = vunpack.c.l.b16 %v477
    %v546 = vunpack.c.l.b16 %v478
    %v547 = vunpack.c.l.b16 %v479
    %v548 = vunpack.c.l.b16 %v480
    %v549 = vunpack.c.l.b16 %v481
    %v550 = vunpack.c.l.b16 %v482
    %v551 = vunpack.c.l.b16 %v483
    %v552 = vunpack.c.l.b16 %v484
    %v553 = vunpack.c.l.b16 %v485
    %v554 = vunpack.c.l.b16 %v486
    %v555 = vunpack.c.l.b16 %v487
    %v556 = vunpack.c.l.b16 %v488
    %v557 = vunpack.c.l.b16 %v489
    %v558 = vpack.c.b16 %v527, %v526
    %v559 = vpack.c.b16 %v529, %v528
    %v560 = vpack.c.b16 %v531, %v530
    %v561 = vpack.c.b16 %v533, %v532
    %v562 = vpack.c.b16 %v535, %v534
    %v563 = vpack.c.b16 %v537, %v536
    %v564 = vpack.c.b16 %v539, %v538
    %v565 = vpack.c.b16 %v541, %v540
    %v566 = vpack.c.b16 %v543, %v542
    %v567 = vpack.c.b16 %v545, %v544
    %v568 = vpack.c.b16 %v547, %v546
    %v569 = vpack.c.b16 %v549, %v548
    %v570 = vpack.c.b16 %v551, %v550
    %v571 = vpack.c.b16 %v553, %v552
    %v572 = vpack.c.b16 %v555, %v554
    %v573 = vpack.c.b16 %v557, %v556
    %590 = vmatpush.bf16.msra.mxu0 %v565
    %591 = vmatpush.bf16.msra.mxu0 %v564
    %592 = vmatpush.bf16.msra.mxu0 %v563
    %593 = vmatpush.bf16.msra.mxu0 %v562
    %594 = vmatpush.bf16.msra.mxu0 %v561
    %595 = vmatpush.bf16.msra.mxu0 %v560
    %596 = vmatpush.bf16.msra.mxu0 %v559
    %597 = vmatpush.bf16.msra.mxu0 %v558
    %598 = vmatmul.bf16.gmra.mxu0 %v456
    %v599 = vpop.f32.mrf.mxu0
    %v600 = vadd.f32 %v492, %v599
    %v601 = vpop.f32.mrf.mxu0
    %602 = vdwg.mxu0
    %603 = vmatpush.bf16.msra.mxu0 %v573
    %604 = vmatpush.bf16.msra.mxu0 %v572
    %605 = vmatpush.bf16.msra.mxu0 %v571
    %606 = vmatpush.bf16.msra.mxu0 %v570
    %607 = vmatpush.bf16.msra.mxu0 %v569
    %608 = vmatpush.bf16.msra.mxu0 %v568
    %609 = vmatpush.bf16.msra.mxu0 %v567
    %610 = vmatpush.bf16.msra.mxu0 %v566
    %611 = vmatmul.bf16.gmra.mxu0 %v457
    %v612 = vpop.f32.mrf.mxu0
    %v613 = vadd.f32 %v600, %v612
    %v614 = vpop.f32.mrf.mxu0
    %615 = vdwg.mxu0
    %616 = vst [vmem:[#allocation10] sm:$0xff] %v613
    // Predicated region
    $region54: #{tpu_custom_call.1} parent=1 // pred_check
      _
    $region55: #{tpu_custom_call.1} parent=1 // pred_check_branch
      %618 = sbr.rel (0) target = $region57
    $region56: #{tpu_custom_call.1} parent=1 // pred_region
      %620 = vsyncadd [#allocation4], 0
      %s622 = sshll.u32 [#allocation10], 4
      %s623 = int_to_ptr.vmem [resolvable:$true] %s622
      %s624 = sshll.u32 %s9, 4
      %s625 = int_to_ptr.hbm [resolvable:$true] %s624
      %627 = dma.vmem_to_hbm [thread:$0]  %s623, 128, %s625, [#allocation4]
    $region57: #{tpu_custom_call.1} parent=1 // pred_fallthru
      _
    // Predicated region
    $region58: #{tpu_custom_call.1} parent=1 // pred_check
      _
    $region59: #{tpu_custom_call.1} parent=1 // pred_check_branch
      %629 = sbr.rel (0) target = $region61
    $region60: #{tpu_custom_call.1} parent=1 // pred_region
      %631 = dma.done [#allocation4], 128
    $region61: #{tpu_custom_call.1} parent=1 // pred_fallthru
      _
    %632 = vsyncpa [#allocation3], 1
    %633 = vsyncpa [#allocation6], 1
    %634 = vsyncpa [#allocation9], 1
    %635 = vsyncpa [#allocation4], 1

</llo_original>
